<compile_context>
chip_gen: v6e
topology: v6e:2x2x1
jax: 0.10.0
libtpu: 0.0.40
codegen_flags: <defaults>
</compile_context>

<pallas_src>
import jax
import jax.numpy as jnp
from jax.experimental import pallas as pl
from jax.experimental.pallas import tpu as pltpu


def _copy_kernel(x_ref, o_ref):
    # Pure copy: the channel shuffle lives in the BlockSpec index maps.
    o_ref[...] = x_ref[...]


def _spatial_fold(h, w):
    """Factor H*W into (s1, s2) minimizing (8, 128) vreg padding.

    Fast path: H*W multiple of 128 -> (HW//128, 128) (fully lane-dense).
    Otherwise search divisor pairs for the fewest vregs per plane, preferring
    the larger lane extent on ties.
    """
    hw = h * w
    if hw % 128 == 0:
        return hw // 128, 128
    best_key, best = None, (1, hw)
    d = 1
    while d * d <= hw:
        if hw % d == 0:
            for s1, s2 in ((d, hw // d), (hw // d, d)):
                vregs = -(-s1 // 8) * -(-s2 // 128)
                key = (vregs, -s2)
                if best_key is None or key < best_key:
                    best_key, best = key, (s1, s2)
        d += 1
    return best


def _vmem_plan():
    """Return (per-block byte cap, vmem_limit_bytes or None), generation-aware.

    Pipelined footprint ~= 2 arrays x 2 buffers x block, so the cap is chosen
    to keep 4x the block comfortably inside scoped VMEM on every generation.
    """
    try:
        vmem = pltpu.get_tpu_info().vmem_capacity_bytes
    except Exception:
        vmem = None
    if vmem is not None and vmem >= 128 * 1024 * 1024:
        # v5e / v6e: 128 MiB physical VMEM.  4 MiB blocks (16 MiB footprint);
        # raise the scoped limit so v5e's 16 MiB default doesn't squeeze the
        # pipeline.  64 MiB is well under physical capacity.
        return 4 * 1024 * 1024, 64 * 1024 * 1024
    # v7x (64 MiB VMEM per TC) or unknown: 2 MiB blocks -> 8 MiB footprint,
    # fits the 32 MiB default scoped limit with double buffering intact.
    return 2 * 1024 * 1024, None


def _choose_tiling(b, cpg, s1, s2, itemsize, cap_bytes):
    """Pick (bblk, cblk, s1_blk): grow channels first (contiguous reads),
    then batch; fall back to spatial tiling for very large planes."""
    plane_bytes = s1 * s2 * itemsize  # one channel's spatial plane
    if plane_bytes > cap_bytes and s1 >= 16:
        # Spatial tiling (very large H*W).  Keep the sublane-dim block a
        # multiple of 8 so the (8, 128) layout rule holds on partial planes.
        rows = max(8, (cap_bytes // (s2 * itemsize)) // 8 * 8)
        return 1, 1, int(min(s1, rows))
    cblk = int(max(1, min(cpg, cap_bytes // plane_bytes)))
    bblk = int(max(1, min(b, cap_bytes // (cblk * plane_bytes))))
    return bblk, cblk, s1


def channel_shuffle(x, groups):
    """x: (B, C, H, W); returns channel-shuffled tensor, same shape/dtype."""
    b, c, h, w = x.shape
    assert c % groups == 0, "channels must be divisible by groups"
    cpg = c // groups
    hw = h * w
    itemsize = x.dtype.itemsize

    s1, s2 = _spatial_fold(h, w)
    cap_bytes, vmem_limit = _vmem_plan()
    bblk, cblk, s1_blk = _choose_tiling(b, cpg, s1, s2, itemsize, cap_bytes)

    # Free row-major reshape: input channel ic = g * cpg + j -> view [b, g, j].
    xv = x.reshape(b, groups, cpg, s1, s2)

    # Output view [b, j, g] flattens to output channel oc = j * groups + g,
    # which must equal input channel g * cpg + j  ->  pure index_map swap.
    grid = (pl.cdiv(b, bblk), groups, pl.cdiv(cpg, cblk), pl.cdiv(s1, s1_blk))

    def in_index_map(bb, g, cc, ss):
        return (bb, g, cc, ss, 0)

    def out_index_map(bb, g, cc, ss):
        return (bb, cc, g, ss, 0)

    cp_kwargs = dict(dimension_semantics=("parallel",) * 4)
    if vmem_limit is not None:
        cp_kwargs["vmem_limit_bytes"] = vmem_limit

    out5 = pl.pallas_call(
        _copy_kernel,
        out_shape=jax.ShapeDtypeStruct((b, cpg, groups, s1, s2), x.dtype),
        grid=grid,
        # None dims are squeezed: both kernel refs are (bblk, cblk, s1_blk, s2).
        in_specs=[pl.BlockSpec((bblk, None, cblk, s1_blk, s2), in_index_map)],
        out_specs=pl.BlockSpec((bblk, cblk, None, s1_blk, s2), out_index_map),
        compiler_params=pltpu.CompilerParams(**cp_kwargs),
        cost_estimate=pl.CostEstimate(
            flops=0,
            transcendentals=0,
            bytes_accessed=2 * b * c * hw * itemsize,
        ),
    )(xv)

    return out5.reshape(b, c, h, w)


def _reference_channel_shuffle(x, groups):
    b, c, h, w = x.shape
    cpg = c // groups
    y = x.reshape(b, groups, cpg, h, w)
    y = jnp.transpose(y, (0, 2, 1, 3, 4))
    return y.reshape(b, c, h, w)


if __name__ == "__main__":
    key = jax.random.PRNGKey(0)
    k1, k2 = jax.random.split(key)

    # Case 1: lane-dense fast path (H*W multiple of 128).
    B, C, H, W = 2, 4, 16, 16
    groups = 2
    x = jax.random.normal(k1, (B, C, H, W), dtype=jnp.float32)
    out = jax.block_until_ready(channel_shuffle(x, groups))
    ref = _reference_channel_shuffle(x, groups)
    assert out.shape == (B, C, H, W)
    assert out.dtype == x.dtype
    assert jnp.array_equal(out, ref), "channel shuffle mismatch vs reference"

    # Case 2: H*W not a multiple of 128 (exercises the divisor fold) and a
    # different group count.
    x2 = jax.random.normal(k2, (2, 6, 12, 12), dtype=jnp.float32)
    out2 = jax.block_until_ready(channel_shuffle(x2, 3))
    ref2 = _reference_channel_shuffle(x2, 3)
    assert jnp.array_equal(out2, ref2), "channel shuffle mismatch (case 2)"

    print("KERNEL_OK")
</pallas_src>

<mosaic_0001>
module attributes {stable_mosaic.version = 11 : i64} {
  func.func @_copy_kernel(%arg0: i32, %arg1: i32, %arg2: i32, %arg3: i32, %arg4: memref<2x1x2x2x128xf32, #tpu.memory_space<vmem>>, %arg5: memref<2x2x1x2x128xf32, #tpu.memory_space<vmem>>) attributes {dimension_semantics = [#tpu.dimension_semantics<parallel>, #tpu.dimension_semantics<parallel>, #tpu.dimension_semantics<parallel>, #tpu.dimension_semantics<parallel>], iteration_bounds = array<i64: 1, 2, 1, 1>, scalar_prefetch = 0 : i64, scratch_operands = 0 : i64, tpu.core_type = #tpu.core_type<tc>, window_params = [{transform_indices = @transform_0, window_bounds = array<i64: 2, 1, 2, 2, 128>}, {transform_indices = @transform_1, window_bounds = array<i64: 2, 2, 1, 2, 128>}]} {
    %c0 = arith.constant 0 : index
    %c0_0 = arith.constant 0 : index
    %c0_1 = arith.constant 0 : index
    %c0_2 = arith.constant 0 : index
    %c0_3 = arith.constant 0 : index
    %0 = vector.load %arg4[%c0, %c0_0, %c0_1, %c0_2, %c0_3] : memref<2x1x2x2x128xf32, #tpu.memory_space<vmem>>, vector<2x1x2x2x128xf32>
    %1 = vector.shape_cast %0 : vector<2x1x2x2x128xf32> to vector<2x2x2x128xf32>
    %c0_4 = arith.constant 0 : index
    %c0_5 = arith.constant 0 : index
    %c0_6 = arith.constant 0 : index
    %c0_7 = arith.constant 0 : index
    %c0_8 = arith.constant 0 : index
    %2 = vector.load %arg5[%c0_4, %c0_5, %c0_6, %c0_7, %c0_8] : memref<2x2x1x2x128xf32, #tpu.memory_space<vmem>>, vector<2x2x1x2x128xf32>
    %3 = vector.shape_cast %2 : vector<2x2x1x2x128xf32> to vector<2x2x2x128xf32>
    %4 = vector.shape_cast %1 : vector<2x2x2x128xf32> to vector<2x2x1x2x128xf32>
    tpu.vector_store %arg5[%c0_4, %c0_5, %c0_6, %c0_7, %c0_8], %4 {strides = array<i32>} : memref<2x2x1x2x128xf32, #tpu.memory_space<vmem>>, vector<2x2x1x2x128xf32>,
    return
  }
  func.func @transform_0(%arg0: i32, %arg1: i32, %arg2: i32, %arg3: i32) -> (i32, i32, i32, i32, i32) {
    %c0_i32 = arith.constant 0 : i32
    %c0_i32_0 = arith.constant 0 : i32
    return %arg0, %arg1, %arg2, %arg3, %c0_i32 : i32, i32, i32, i32, i32
  }
  func.func @transform_1(%arg0: i32, %arg1: i32, %arg2: i32, %arg3: i32) -> (i32, i32, i32, i32, i32) {
    %c0_i32 = arith.constant 0 : i32
    %c0_i32_0 = arith.constant 0 : i32
    return %arg0, %arg2, %arg1, %arg3, %c0_i32 : i32, i32, i32, i32, i32
  }
}

</mosaic_0001>

<llo_original>
// kernel: tpu_custom_call.1
$region0: #{tpu_custom_call.1}
  #allocation0 [shape = 'u32[]', space=smem, size = 0x4, offset = 0x4, fixed_abs, tag = 'smem constant byte address 0x4 - core index']
  #allocation1 [shape = 'u32[144,128]{1,0:T(1,128)}', space=vmem, size = 0x12000, scoped, tag = 'internal scratch']
  #allocation6 [shape = 's32[]', space=sflag, size = 0x4, offset = 0, fixed_abs, tag = 'sflag constant byte address 0x0 - dummy sync flag']
  %s0 = inlined_call_operand.hbm [shape: f32[2,2,2,2,128], index: 0, kind: input, shape index: {}]
  %s1 = inlined_call_operand.hbm [shape: f32[2,2,2,2,128], index: 1, kind: output, shape index: {}]
  %s2 = sld [smem:[#allocation0]]
  $region41: #{tpu_custom_call.1} parent=0
    _
  %s4 = ssub.s32 1, %s2
  %s5 = scalar_select 0, %s4, %s2
  $region1: #{tpu_custom_call.1} parent=0
    #allocation2 [shape = 'u8[8192]{0}', space=vmem, size = 0x2000, scoped, tag = 'input window, operand 0']
    #allocation3 [shape = 's32[2]{0}', space=sflag, size = 0x8, scoped, tag = 'scoped memory for tpu_custom_call.1']
    #allocation4 [shape = 's32[2]{0}', space=sflag, size = 0x8, scoped, tag = 'scoped memory for tpu_custom_call.1']
    #allocation5 [shape = 'u8[8192]{0}', space=vmem, size = 0x2000, scoped, tag = 'output window, operand 0']
    %6 = vsyncpa [#allocation3], 0
    %s7 = scalar_lea.sflag [#allocation3], 1
    %8 = vsyncpa %s7, 0
    %9 = vsyncpa [#allocation4], 0
    %s10 = scalar_lea.sflag [#allocation4], 1
    %11 = vsyncpa %s10, 0
    loop: start=0, step=1, limit=4
    $region2: #{tpu_custom_call.1} parent=1 // loop_pre_header
      _
    $region3: #{tpu_custom_call.1} parent=1 // loop_header
      %s13 = sphi 0, %s17
      %p14 = scmp.ge.s32.totalorder %s13, 4
      %s20 = sphi 0, %s46
      %s21 = sphi 0, %s42
      %s22 = sphi 0, %s38
      %s23 = sphi 0, %s34
      %s24 = sphi 0, %s20
      %s25 = sphi 0, %s21
      %s26 = sphi 0, %s22
      %s27 = sphi 0, %s23
      %s28 = sphi 0, %s24
      %s29 = sphi 0, %s25
      %s30 = sphi 0, %s26
      %s31 = sphi 0, %s27
      %s55 = sphi 0, %s57
      %s58 = sphi 0, %s55
      %s59 = sphi 0, %s58
      %s75 = sphi 0, %s59
      %s87 = sphi 0, %s89
      %s90 = sphi 0, %s87
      %s91 = sphi 0, %s90
      %s107 = sphi 0, %s91
    $region4: #{tpu_custom_call.1} parent=1 // loop_header_branch
      %16 = sbr.rel (%p14) target = $region8
    $region5: #{tpu_custom_call.1} parent=1 // loop_body
      %s18 = ssub.s32 %s13, 1
      %s19 = ssub.s32 %s13, 2
      %s32 = sadd.s32 1, %s23
      %p33 = scmp.ge.s32.totalorder %s32, 1
      %s34 = scalar_select %p33, 0, %s32
      %s35 = sadd.s32 1, %s22
      %s36 = scalar_select %p33, %s35, %s22
      %p37 = scmp.ge.s32.totalorder %s36, 1
      %s38 = scalar_select %p37, 0, %s36
      %s39 = sadd.s32 1, %s21
      %s40 = scalar_select %p37, %s39, %s21
      %p41 = scmp.ge.s32.totalorder %s40, 2
      %s42 = scalar_select %p41, 0, %s40
      %s43 = sadd.s32 1, %s20
      %s44 = scalar_select %p41, %s43, %s20
      %p45 = scmp.ge.s32.totalorder %s44, 1
      %s46 = scalar_select %p45, 0, %s44
      %s47 = ssub.s32 %s20, %s46
      %s48 = ssub.s32 %s21, %s42
      %s49 = sor.u32 %s47, %s48
      %s50 = ssub.s32 %s22, %s38
      %s51 = sor.u32 %s49, %s50
      %s52 = ssub.s32 %s23, %s34
      %s53 = sor.u32 %s51, %s52
      %p54 = scmp.eq.s32.totalorder %s53, 0
      %s56 = sadd.s32 %s55, 1
      %s57 = scalar_select %p54, %s55, %s56
      %p60 = pneg %p54
      %p61 = scmp.eq.s32.totalorder %s13, 1
      %p62 = por %p60, %p61
      %p63 = scmp.ne.s32.totalorder %s55, %s58
      %p64 = scmp.eq.s32.totalorder %s13, 0
      %p65 = por %p63, %p64
      %p66 = scmp.ne.s32.totalorder %s55, %s58
      %p67 = scmp.eq.s32.totalorder %s18, 1
      %p68 = por %p66, %p67
      %p69 = scmp.ne.s32.totalorder %s58, %s59
      %p70 = scmp.eq.s32.totalorder %s18, 0
      %p71 = por %p69, %p70
      %p72 = scmp.ne.s32.totalorder %s58, %s59
      %p73 = scmp.eq.s32.totalorder %s19, 1
      %p74 = por %p72, %p73
      %p76 = scmp.ne.s32.totalorder %s59, %s75
      %p77 = scmp.eq.s32.totalorder %s19, 0
      %p78 = por %p76, %p77
      %s79 = ssub.s32 %s20, %s46
      %s80 = ssub.s32 %s22, %s38
      %s81 = sor.u32 %s79, %s80
      %s82 = ssub.s32 %s21, %s42
      %s83 = sor.u32 %s81, %s82
      %s84 = ssub.s32 %s23, %s34
      %s85 = sor.u32 %s83, %s84
      %p86 = scmp.eq.s32.totalorder %s85, 0
      %s88 = sadd.s32 %s87, 1
      %s89 = scalar_select %p86, %s87, %s88
      %p92 = pneg %p86
      %p93 = scmp.eq.s32.totalorder %s13, 1
      %p94 = por %p92, %p93
      %p95 = scmp.ne.s32.totalorder %s87, %s90
      %p96 = scmp.eq.s32.totalorder %s13, 0
      %p97 = por %p95, %p96
      %p98 = scmp.ne.s32.totalorder %s87, %s90
      %p99 = scmp.eq.s32.totalorder %s18, 1
      %p100 = por %p98, %p99
      %p101 = scmp.ne.s32.totalorder %s90, %s91
      %p102 = scmp.eq.s32.totalorder %s18, 0
      %p103 = por %p101, %p102
      %p104 = scmp.ne.s32.totalorder %s90, %s91
      %p105 = scmp.eq.s32.totalorder %s19, 1
      %p106 = por %p104, %p105
      %p108 = scmp.ne.s32.totalorder %s91, %s107
      %p109 = scmp.eq.s32.totalorder %s19, 0
      %p110 = por %p108, %p109
      %p111 = scmp.le.s32.totalorder 1, %s13
      %p112 = scmp.lt.s32.totalorder %s13, 3
      %p113 = pnand %p111, %p112
      %p114 = pneg %p113
      // Predicated region
      $region9: #{tpu_custom_call.1} parent=5 // pred_check
        _
      $region10: #{tpu_custom_call.1} parent=5 // pred_check_branch
        %116 = sbr.rel (%p113) target = $region12
      $region11: #{tpu_custom_call.1} parent=5 // pred_region
        %s117 = ssub.s32 %s13, 1
      $region12: #{tpu_custom_call.1} parent=5 // pred_fallthru
        _
      %p118 = scmp.lt.s32.totalorder %s13, 2
      // Predicated region
      $region13: #{tpu_custom_call.1} parent=5 // pred_check
        %p119 = pneg %p118
      $region14: #{tpu_custom_call.1} parent=5 // pred_check_branch
        %121 = sbr.rel (%p119) target = $region16
      $region15: #{tpu_custom_call.1} parent=5 // pred_region
        // Predicated region
        $region17: #{tpu_custom_call.1} parent=15 // pred_check
          %p122 = pneg %p65
        $region18: #{tpu_custom_call.1} parent=15 // pred_check_branch
          %124 = sbr.rel (%p122) target = $region20
        $region19: #{tpu_custom_call.1} parent=15 // pred_region
          #allocation7 [shape = 'u32[6]{0}', space=smem, size = 0x18, scoped, tag = 'DMA stride descriptor']
          %s125 = sand.u32 %s55, 1
          %s126 = scalar_lea.sflag [#allocation3], %s125
          %s127 = sand.u32 %s55, 1
          %s128 = smul.addr %s127, 8
          %s129 = scalar_lea.vmem [#allocation2], %s128
          %s130 = smul.u32 2, %s20
          %s131 = smul.u32 2, %s22
          %s133 = ssub.s32 128, 128
          %134 = vsyncadd %s126, %s133
          %s135 = sadd.s32 %s23, %s131
          %s136 = smul.addr %s21, 2
          %s137 = sadd.s32 %s135, %s136
          %s138 = smul.addr %s130, 4
          %s139 = sadd.s32 %s137, %s138
          %s140 = smul.addr %s139, 32
          %s141 = scalar_lea.hbm %s0, %s140
          %s143 = sshll.u32 1, 14
          %s144 = sxor.u32 4294967295, %s143
          %s146 = sld [smem:[#allocation0]]
          %s147 = sadd.s32 2, %s146
          %s149 = sshll.u32 7, 26
          %s150 = sxor.u32 4294967295, %s149
          %s151 = sand.u32 0, %s150
          %s152 = sshll.u32 %s147, 26
          %s153 = sor.u32 %s151, %s152
          %s154 = sshll.u32 %s129, 4
          %s155 = int_to_ptr.vmem [resolvable:$true] %s154
          %161 = sst [smem:[#allocation7]] 128
          %s162 = scalar_lea.smem [#allocation7], 1
          %163 = sst [smem:[%s162]] 64
          %s164 = scalar_lea.smem [#allocation7], 2
          %165 = sst [smem:[%s164]] 2
          %s166 = scalar_lea.smem [#allocation7], 3
          %167 = sst [smem:[%s166]] 32
          %s168 = scalar_lea.smem [#allocation7], 4
          %169 = sst [smem:[%s168]] 32
          %s170 = scalar_lea.smem [#allocation7], 5
          %171 = sst [smem:[%s170]] 2
          %173 = dma.general %s141, 128, %s155, %s126, 131072, [#allocation7], %s153, 0
        $region20: #{tpu_custom_call.1} parent=15 // pred_fallthru
          _
      $region16: #{tpu_custom_call.1} parent=5 // pred_fallthru
        _
      %p174 = scmp.le.s32.totalorder 1, %s13
      %p175 = scmp.lt.s32.totalorder %s13, 3
      %p176 = pnand %p174, %p175
      %p177 = pneg %p176
      // Predicated region
      $region21: #{tpu_custom_call.1} parent=5 // pred_check
        _
      $region22: #{tpu_custom_call.1} parent=5 // pred_check_branch
        %179 = sbr.rel (%p176) target = $region24
      $region23: #{tpu_custom_call.1} parent=5 // pred_region
        %s180 = ssub.s32 %s13, 1
        %s181 = sand.u32 %s58, 1
        %s182 = scalar_lea.sflag [#allocation3], %s181
        %s183 = sand.u32 %s58, 1
        %s184 = smul.addr %s183, 8
        %s185 = scalar_lea.vmem [#allocation2], %s184
        // Predicated region
        $region25: #{tpu_custom_call.1} parent=23 // pred_check
          %p186 = pneg %p71
        $region26: #{tpu_custom_call.1} parent=23 // pred_check_branch
          %188 = sbr.rel (%p186) target = $region28
        $region27: #{tpu_custom_call.1} parent=23 // pred_region
          %189 = dma.done %s182, 128
        $region28: #{tpu_custom_call.1} parent=23 // pred_fallthru
          _
        %s190 = sand.u32 %s58, 1
        %s191 = scalar_lea.sflag [#allocation3], %s190
        %s192 = sand.u32 %s58, 1
        %s193 = smul.addr %s192, 8
        %s194 = scalar_lea.vmem [#allocation2], %s193
        %p195 = pneg %p71
        %p196 = pneg %p68
        %p197 = pneg %p103
        %p198 = pneg %p100
        %s199 = sand.u32 %s90, 1
        %s200 = scalar_lea.sflag [#allocation4], %s199
        %s201 = sand.u32 %s90, 1
        %s202 = smul.addr %s201, 8
        %s203 = scalar_lea.vmem [#allocation5], %s202
        %s204 = smul.u32 2, %s24
        %s205 = smul.u32 2, %s26
        %s206 = smul.u32 2, %s24
        %s207 = smul.u32 2, %s26
        %v208 = vld [vmem:[%s185] sm:$0x3]
        %v209 = vld [vmem:[%s185 + $0x2] sm:$0x3]
        %v210 = vld [vmem:[%s185 + $0x4] sm:$0x3]
        %v211 = vld [vmem:[%s185 + $0x6] sm:$0x3]
        %212 = vst [vmem:[%s203] sm:$0x3] %v208
        %213 = vst [vmem:[%s203 + $0x2] sm:$0x3] %v209
        %214 = vst [vmem:[%s203 + $0x4] sm:$0x3] %v210
        %215 = vst [vmem:[%s203 + $0x6] sm:$0x3] %v211
        %s216 = sand.u32 %s90, 1
        %s217 = scalar_lea.sflag [#allocation4], %s216
        %s218 = sand.u32 %s90, 1
        %s219 = smul.addr %s218, 8
        %s220 = scalar_lea.vmem [#allocation5], %s219
        // Predicated region
        $region29: #{tpu_custom_call.1} parent=23 // pred_check
          %p221 = pneg %p100
        $region30: #{tpu_custom_call.1} parent=23 // pred_check_branch
          %223 = sbr.rel (%p221) target = $region32
        $region31: #{tpu_custom_call.1} parent=23 // pred_region
          %s224 = smul.u32 2, %s24
          %s225 = smul.u32 2, %s26
          %s227 = ssub.s32 128, 128
          %228 = vsyncadd %s217, %s227
          %s229 = sadd.s32 %s27, %s25
          %s230 = smul.addr %s225, 2
          %s231 = sadd.s32 %s229, %s230
          %s232 = smul.addr %s224, 4
          %s233 = sadd.s32 %s231, %s232
          %s234 = smul.addr %s233, 32
          %s235 = scalar_lea.hbm %s1, %s234
          %s236 = sshll.u32 %s220, 4
          %s237 = int_to_ptr.vmem [resolvable:$true] %s236
          %242 = dma.vmem_to_hbm [thread:$0]  %s237, 128, %s235, %s217, 32, 64, 2
        $region32: #{tpu_custom_call.1} parent=23 // pred_fallthru
          _
      $region24: #{tpu_custom_call.1} parent=5 // pred_fallthru
        _
      %p243 = scmp.le.s32.totalorder 2, %s13
      // Predicated region
      $region33: #{tpu_custom_call.1} parent=5 // pred_check
        %p244 = pneg %p243
      $region34: #{tpu_custom_call.1} parent=5 // pred_check_branch
        %246 = sbr.rel (%p244) target = $region36
      $region35: #{tpu_custom_call.1} parent=5 // pred_region
        %s247 = ssub.s32 %s13, 2
        // Predicated region
        $region37: #{tpu_custom_call.1} parent=35 // pred_check
          %p248 = pneg %p106
        $region38: #{tpu_custom_call.1} parent=35 // pred_check_branch
          %250 = sbr.rel (%p248) target = $region40
        $region39: #{tpu_custom_call.1} parent=35 // pred_region
          %s251 = sand.u32 %s91, 1
          %s252 = scalar_lea.sflag [#allocation4], %s251
          %s253 = sand.u32 %s91, 1
          %s254 = smul.addr %s253, 8
          %s255 = scalar_lea.vmem [#allocation5], %s254
          %256 = dma.done %s252, 128
        $region40: #{tpu_custom_call.1} parent=35 // pred_fallthru
          _
      $region36: #{tpu_custom_call.1} parent=5 // pred_fallthru
        _
    $region6: #{tpu_custom_call.1} parent=1 // loop_footer
      %s17 = sadd.s32 1, %s13
    $region7: #{tpu_custom_call.1} parent=1 // loop_footer_branch
      %12 = sbr.rel target = $region3
    $region8: #{tpu_custom_call.1} parent=1 // loop_exit
      _
    %257 = vsyncpa [#allocation3], 1
    %s258 = scalar_lea.sflag [#allocation3], 1
    %259 = vsyncpa %s258, 1
    %260 = vsyncpa [#allocation4], 1
    %s261 = scalar_lea.sflag [#allocation4], 1
    %262 = vsyncpa %s261, 1

</llo_original>
